<compile_context>
chip_gen: v7x
topology: tpu7x:2x2x1
jax: 0.10.0
libtpu: 0.0.40
codegen_flags: <defaults>
</compile_context>

<pallas_src>
import jax
import jax.numpy as jnp
from jax import lax
from jax.experimental import pallas as pl
from jax.experimental.pallas import tpu as pltpu

_LANES = 128
_SUB_ROWS = 256              # rows per inner accumulation step (256x128 f32 = 128 KiB ~ 32 vregs)
_DEFAULT_BLOCK_ROWS = 4096   # streaming DMA chunk: 4096x128 f32 = 2 MiB (x2 buffers = 4 MiB VMEM)
_KERNEL_MIN_ELEMS = 64 * 1024    # per-weight floor for the Pallas path
_SMALL_BYPASS_BYTES = 2 << 20    # below this total, plain XLA reduction wins outright


def _row_align(dtype):
    """Sublane packing factor (rows per 32-bit word group): f32->8, bf16->16, int8->32."""
    return max(8, 32 // dtype.itemsize)


def _default_num_splits():
    """2 on dual-TensorCore (megacore) chips: v4 / v5p / v7x.  1 on v5e / v6e."""
    try:
        kind = jax.devices()[0].device_kind.lower()
    except Exception:
        return 1
    if any(tag in kind for tag in ("v4", "v5p", "7")):
        return 2
    return 1


# ---------------------------------------------------------------------------
# Kernel: fused sum-of-squares over a list of same-dtype (rows_i, 128) HBM
# views.  Manual double-buffered DMA (HBM -> shared VMEM chunk), (8,128) f32
# accumulator, grid = (num_splits,) 'parallel' for megacore chips.
# ---------------------------------------------------------------------------
def _make_sumsq_kernel(metas, block_rows, num_splits):
    """metas: per-weight (full_chunks, tail_rows); all static Python ints."""
    n_w = len(metas)

    def kernel(*args):
        w_refs = args[:n_w]          # HBM (memory_space=pl.ANY) refs, (rows_i, 128)
        o_ref = args[n_w]            # (8, 128) f32 output block for this split
        buf = args[n_w + 1]          # VMEM (2, block_rows, 128), native dtype
        sem = args[n_w + 2]          # DMA semaphores (2,)
        acc = args[n_w + 3]          # VMEM (8, 128) f32 accumulator

        acc[...] = jnp.zeros_like(acc)
        split = pl.program_id(0)

        def accum_rows(slot, rows):
            # acc += per-(sublane, lane) partial sums of buf[slot, :rows]**2.
            # Processed in 256-row sub-tiles so intermediates stay ~32 vregs.
            # reshape (rr,128)->(rr//8,8,128) is layout-preserving; the axis-0
            # sum is a pure-VALU tree of vreg adds (no XLU).
            r0 = 0
            while r0 < rows:                       # static Python loop
                rr = min(_SUB_ROWS, rows - r0)
                x = buf[slot, pl.ds(r0, rr), :].astype(jnp.float32)
                acc[...] += jnp.sum((x * x).reshape(rr // 8, 8, _LANES), axis=0)
                r0 += rr

        def start_copy(w_ref, row_start, slot):
            src = w_ref.at[pl.ds(row_start, block_rows), :]
            pltpu.make_async_copy(src, buf.at[slot], sem.at[slot]).start()

        def wait_copy(w_ref, slot):
            pltpu.make_async_copy(
                w_ref.at[pl.ds(0, block_rows), :], buf.at[slot], sem.at[slot]).wait()

        # Static unroll over weights; dynamic (fori) loop over each weight's chunks.
        for w_idx, (full_chunks, tail_rows) in enumerate(metas):
            w_ref = w_refs[w_idx]

            if full_chunks > 0:
                if num_splits > 1:
                    # Contiguous chunk range per TensorCore.
                    cps = pl.cdiv(full_chunks, num_splits)     # static
                    lo = split * cps
                    n_my = jnp.minimum(full_chunks, lo + cps) - lo

                    @pl.when(n_my > 0)
                    def _():
                        start_copy(w_ref, pl.multiple_of(lo * block_rows, 8), 0)
                else:
                    lo = 0
                    n_my = full_chunks
                    start_copy(w_ref, 0, 0)

                def body(j, carry):
                    slot = j % 2
                    wait_copy(w_ref, slot)         # chunk lo+j is ready

                    @pl.when(j + 1 < n_my)
                    def _():                        # prefetch next chunk (other slot)
                        row = (lo + j + 1) * block_rows
                        start_copy(w_ref, pl.multiple_of(row, 8), 1 - slot)

                    accum_rows(slot, block_rows)
                    return carry

                lax.fori_loop(0, n_my, body, 0)

            if tail_rows > 0:
                # Ragged tail (< block_rows rows, sublane-pack aligned); tiny,
                # so a blocking copy on one split is fine.
                def do_tail():
                    src = w_ref.at[pl.ds(full_chunks * block_rows, tail_rows), :]
                    dst = buf.at[0, pl.ds(0, tail_rows), :]
                    cp = pltpu.make_async_copy(src, dst, sem.at[0])
                    cp.start()
                    cp.wait()
                    accum_rows(0, tail_rows)

                if num_splits > 1:
                    pl.when(split == 0)(do_tail)
                else:
                    do_tail()

        o_ref[...] = acc[...]

    return kernel


def _pallas_group_sum_sq(weights, *, block_rows, num_splits):
    """Fused sum(w**2) over same-dtype, lane/sublane-aligned weights (f32 scalar)."""
    dtype = weights[0].dtype
    align = _row_align(dtype)
    br = max(align, (block_rows // align) * align)   # chunk rows, sublane-pack aligned

    views, metas, total_elems = [], [], 0
    for w in weights:
        n = int(w.size)
        rows = n // _LANES
        # Under jit this reshape is a layout-preserving bitcast (no HBM copy).
        views.append(w.reshape(rows, _LANES))
        metas.append((rows // br, rows % br))
        total_elems += n

    itemsize = dtype.itemsize
    buf_bytes = 2 * br * _LANES * itemsize
    out_rows = 8 * num_splits

    out = pl.pallas_call(
        _make_sumsq_kernel(metas, br, num_splits),
        out_shape=jax.ShapeDtypeStruct((out_rows, _LANES), jnp.float32),
        grid_spec=pltpu.PrefetchScalarGridSpec(
            num_scalar_prefetch=0,
            grid=(num_splits,),
            in_specs=[pl.BlockSpec(memory_space=pl.ANY)] * len(views),
            out_specs=pl.BlockSpec((8, _LANES), lambda c: (c, 0)),
            scratch_shapes=[
                pltpu.VMEM((2, br, _LANES), dtype),       # shared double buffer
                pltpu.SemaphoreType.DMA((2,)),
                pltpu.VMEM((8, _LANES), jnp.float32),     # small accumulator
            ],
        ),
        compiler_params=pltpu.CompilerParams(
            dimension_semantics=(("parallel",) if num_splits > 1 else ("arbitrary",)),
            vmem_limit_bytes=int(buf_bytes + (12 << 20)),
        ),
        cost_estimate=pl.CostEstimate(
            flops=2 * total_elems,
            bytes_accessed=total_elems * itemsize + out_rows * _LANES * 4,
            transcendentals=0,
        ),
    )(*views)
    # Per-(sublane, lane) partials from each split; tiny wrapper-side reduce.
    return jnp.sum(out)


def _fused_sum_of_squares(arrays, *, block_rows=_DEFAULT_BLOCK_ROWS, num_splits=None,
                          kernel_min_elems=_KERNEL_MIN_ELEMS,
                          small_bypass_bytes=_SMALL_BYPASS_BYTES):
    """sum_i sum(arrays[i]**2), accumulated in float32."""
    if not arrays:
        return jnp.float32(0.0)
    if num_splits is None:
        num_splits = _default_num_splits()

    # Kernel-eligible: big enough and size divisible by 128 * sublane packing
    # (so the flat (rows,128) view and every DMA slice stay tile-aligned).
    kernel_ws, plain_ws = [], []
    for a in arrays:
        n = int(a.size)
        if n >= kernel_min_elems and n % (_LANES * _row_align(a.dtype)) == 0:
            kernel_ws.append(a)
        else:
            plain_ws.append(a)

    kernel_bytes = sum(int(a.size) * a.dtype.itemsize for a in kernel_ws)
    if kernel_bytes < small_bypass_bytes:
        plain_ws, kernel_ws = plain_ws + kernel_ws, []   # small-model bypass

    total = jnp.float32(0.0)
    for w in plain_ws:
        total = total + jnp.sum(w.astype(jnp.float32) ** 2)

    # Group kernel-eligible weights by dtype (one fused pallas_call per group;
    # weights move over HBM at native width, f32 cast happens in-kernel).
    groups = {}
    for w in kernel_ws:
        groups.setdefault(w.dtype, []).append(w)
    for ws in groups.values():
        total = total + _pallas_group_sum_sq(ws, block_rows=block_rows,
                                             num_splits=num_splits)
    return total


# ---------------------------------------------------------------------------
# Module-equivalent wrapper.  `model_params` is a dict {name: array}, standing
# in for model.named_parameters().
# ---------------------------------------------------------------------------
def loss_with_l2_regularization(loss, model_params, weight_decay=1e-05, flag=False,
                                **sumsq_opts):
    conv_weights = [(k, v) for k, v in model_params.items()
                    if 'conv' in k and 'weight' in k]
    if not conv_weights:
        return loss

    if flag:
        # Debug path (per-weight prints), off the hot path.
        # TODO(synk): under jit this prints traced values, like the original module would.
        total = jnp.float32(0.0)
        for k, v in conv_weights:
            penality = weight_decay * (jnp.sum(v.astype(jnp.float32) ** 2) / 2.0)
            print('{} : {}'.format(k, penality))
            total = total + penality
        return loss + total

    # Hot path: weight_decay is shared across weights, so one fused reduction
    # scaled once equals the sum of per-weight penalties.
    total_sq = _fused_sum_of_squares([v for _, v in conv_weights], **sumsq_opts)
    return loss + weight_decay * (total_sq / 2.0)


if __name__ == "__main__":
    key = jax.random.PRNGKey(0)
    keys = jax.random.split(key, 9)

    # Small synthetic CNN parameters (PyTorch OIHW conv convention).  Only
    # 'conv*weight' entries contribute; conv4 is bf16 to exercise the
    # native-dtype grouping path.
    model_params = {
        "conv1.weight": jax.random.normal(keys[0], (8, 4, 3, 3), dtype=jnp.float32) * 0.1,
        "conv1.bias":   jax.random.normal(keys[1], (8,), dtype=jnp.float32) * 0.1,
        "conv2.weight": jax.random.normal(keys[2], (16, 8, 3, 3), dtype=jnp.float32) * 0.1,
        "conv2.bias":   jax.random.normal(keys[3], (16,), dtype=jnp.float32) * 0.1,
        "conv3.weight": jax.random.normal(keys[4], (64, 64, 3, 3), dtype=jnp.float32) * 0.1,
        "conv3.bias":   jax.random.normal(keys[5], (64,), dtype=jnp.float32) * 0.1,
        "conv4.weight": (jax.random.normal(keys[6], (64, 32, 3, 3), dtype=jnp.float32)
                         * 0.1).astype(jnp.bfloat16),
        "fc.weight":    jax.random.normal(keys[7], (10, 64), dtype=jnp.float32) * 0.1,
        "fc.bias":      jax.random.normal(keys[8], (10,), dtype=jnp.float32) * 0.1,
    }
    loss_in = jnp.float32(1.2345)
    wd = 1e-05

    # Pure-JAX reference (per-weight, like the PyTorch module).
    ref = loss_in
    ref_sq = jnp.float32(0.0)
    for k, v in model_params.items():
        if 'conv' in k and 'weight' in k:
            sq = jnp.sum(v.astype(jnp.float32) ** 2)
            ref = ref + wd * (sq / 2.0)
            ref_sq = ref_sq + sq

    # 1) Default path: tiny model -> small-size bypass (plain fused XLA reduce).
    out_default = jax.block_until_ready(
        loss_with_l2_regularization(loss_in, model_params, weight_decay=wd))
    assert jnp.allclose(out_default, ref, rtol=1e-5, atol=1e-6), (out_default, ref)

    # 2) Force the Pallas path under jit, with a small streaming chunk so the
    #    double-buffered DMA loop, ragged tail, and bf16 group all execute.
    forced = jax.jit(lambda l, p: loss_with_l2_regularization(
        l, p, weight_decay=wd,
        kernel_min_elems=0, small_bypass_bytes=0, block_rows=64, num_splits=1))
    out_kernel = jax.block_until_ready(forced(loss_in, model_params))
    assert jnp.allclose(out_kernel, ref, rtol=1e-5, atol=1e-6), (out_kernel, ref)

    # 3) Exercise the dual-TensorCore ('parallel') split path explicitly.
    conv_ws = [v for k, v in model_params.items() if 'conv' in k and 'weight' in k]
    sq_split = jax.block_until_ready(_fused_sum_of_squares(
        conv_ws, kernel_min_elems=0, small_bypass_bytes=0, block_rows=64, num_splits=2))
    assert jnp.allclose(sq_split, ref_sq, rtol=1e-4, atol=1e-4), (sq_split, ref_sq)

    # 4) Default (large) chunk size: each small demo weight flows through the
    #    aligned-tail path in a single pass.
    sq_big = jax.block_until_ready(_fused_sum_of_squares(
        conv_ws, kernel_min_elems=0, small_bypass_bytes=0))
    assert jnp.allclose(sq_big, ref_sq, rtol=1e-4, atol=1e-4), (sq_big, ref_sq)

    print("KERNEL_OK")
</pallas_src>

<mosaic_0001>
module attributes {stable_mosaic.version = 11 : i64} {
  func.func @kernel(%arg0: i32, %arg1: memref<288x128xf32, #tpu.memory_space<any>>, %arg2: memref<8x128xf32, #tpu.memory_space<vmem>>, %arg3: memref<2x64x128xf32, #tpu.memory_space<vmem>>, %arg4: memref<2x!tpu.dma_semaphore, #tpu.memory_space<semaphore_mem>>, %arg5: memref<8x128xf32, #tpu.memory_space<vmem>>) attributes {dimension_semantics = [#tpu.dimension_semantics<arbitrary>], iteration_bounds = array<i64: 1>, scalar_prefetch = 0 : i64, scratch_operands = 3 : i64, tpu.core_type = #tpu.core_type<tc>, window_params = [{}, {transform_indices = @transform_1, window_bounds = array<i64: 8, 128>}]} {
    %cst = arith.constant 0.000000e+00 : f32
    %0 = vector.broadcast %cst : f32 to vector<8x128xf32>
    %c0 = arith.constant 0 : index
    %c0_0 = arith.constant 0 : index
    %1 = vector.load %arg5[%c0, %c0_0] : memref<8x128xf32, #tpu.memory_space<vmem>>, vector<8x128xf32>
    tpu.vector_store %arg5[%c0, %c0_0], %0 {strides = array<i32>} : memref<8x128xf32, #tpu.memory_space<vmem>>, vector<8x128xf32>,
    %c0_i32 = arith.constant 0 : i32
    %c0_i32_1 = arith.constant 0 : i32
    %c0_i32_2 = arith.constant 0 : i32
    %c0_i32_3 = arith.constant 0 : i32
    %2 = tpu.memref_slice %arg1[%c0_i32_2, %c0_i32_3] : memref<288x128xf32, #tpu.memory_space<any>> -> memref<64x128xf32, #tpu.memory_space<any>>
    %c0_i32_4 = arith.constant 0 : i32
    %c0_i32_5 = arith.constant 0 : i32
    %3 = tpu.memref_slice %arg3[%c0_i32, %c0_i32_4, %c0_i32_5] : memref<2x64x128xf32, #tpu.memory_space<vmem>> -> memref<1x64x128xf32, #tpu.memory_space<vmem>>
    %4 = tpu.memref_squeeze %3 : memref<1x64x128xf32, #tpu.memory_space<vmem>> -> memref<64x128xf32, #tpu.memory_space<vmem>>
    %5 = tpu.memref_slice %arg4[%c0_i32_1] : memref<2x!tpu.dma_semaphore, #tpu.memory_space<semaphore_mem>> -> memref<1x!tpu.dma_semaphore, #tpu.memory_space<semaphore_mem>>
    %6 = tpu.memref_squeeze %5 : memref<1x!tpu.dma_semaphore, #tpu.memory_space<semaphore_mem>> -> memref<!tpu.dma_semaphore, #tpu.memory_space<semaphore_mem>>
    tpu.enqueue_dma source(%2 : memref<64x128xf32, #tpu.memory_space<any>>) target(%4 : memref<64x128xf32, #tpu.memory_space<vmem>>) target_semaphore(%6 : memref<!tpu.dma_semaphore, #tpu.memory_space<semaphore_mem>>)
    %c0_i32_6 = arith.constant 0 : i32
    %c4_i32 = arith.constant 4 : i32
    %7 = arith.addi %c0_i32_6, %c4_i32 : i32
    %c1_i32 = arith.constant 1 : i32
    scf.for %arg6 = %c0_i32_6 to %7 step %c1_i32  : i32 {
      %c2_i32 = arith.constant 2 : i32
      %c0_i32_31 = arith.constant 0 : i32
      %28 = arith.cmpi eq, %c2_i32, %c0_i32_31 : i32
      %c1_i32_32 = arith.constant 1 : i32
      %29 = arith.select %28, %c1_i32_32, %c2_i32 : i32
      %30 = arith.remsi %arg6, %29 : i32
      %c0_i32_33 = arith.constant 0 : i32
      %31 = arith.cmpi ne, %30, %c0_i32_33 : i32
      %c0_i32_34 = arith.constant 0 : i32
      %32 = arith.cmpi slt, %30, %c0_i32_34 : i32
      %c0_i32_35 = arith.constant 0 : i32
      %33 = arith.cmpi slt, %29, %c0_i32_35 : i32
      %34 = arith.xori %32, %33 : i1
      %35 = arith.andi %34, %31 : i1
      %36 = arith.addi %30, %29 : i32
      %37 = arith.select %35, %36, %30 : i32
      %c0_i32_36 = arith.constant 0 : i32
      %c0_i32_37 = arith.constant 0 : i32
      %38 = tpu.memref_slice %arg1[%c0_i32_36, %c0_i32_37] : memref<288x128xf32, #tpu.memory_space<any>> -> memref<64x128xf32, #tpu.memory_space<any>>
      %c0_i32_38 = arith.constant 0 : i32
      %c0_i32_39 = arith.constant 0 : i32
      %39 = tpu.memref_slice %arg3[%37, %c0_i32_38, %c0_i32_39] : memref<2x64x128xf32, #tpu.memory_space<vmem>> -> memref<1x64x128xf32, #tpu.memory_space<vmem>>
      %40 = tpu.memref_squeeze %39 : memref<1x64x128xf32, #tpu.memory_space<vmem>> -> memref<64x128xf32, #tpu.memory_space<vmem>>
      %41 = tpu.memref_slice %arg4[%37] : memref<2x!tpu.dma_semaphore, #tpu.memory_space<semaphore_mem>> -> memref<1x!tpu.dma_semaphore, #tpu.memory_space<semaphore_mem>>
      %42 = tpu.memref_squeeze %41 : memref<1x!tpu.dma_semaphore, #tpu.memory_space<semaphore_mem>> -> memref<!tpu.dma_semaphore, #tpu.memory_space<semaphore_mem>>
      tpu.wait_dma2 semaphore(%42 : memref<!tpu.dma_semaphore, #tpu.memory_space<semaphore_mem>>) src(%38 : memref<64x128xf32, #tpu.memory_space<any>>) dst(%40 : memref<64x128xf32, #tpu.memory_space<vmem>>)
      %c1_i32_40 = arith.constant 1 : i32
      %43 = arith.addi %arg6, %c1_i32_40 : i32
      %c4_i32_41 = arith.constant 4 : i32
      %44 = arith.cmpi slt, %43, %c4_i32_41 : i32
      %45 = arith.extui %44 : i1 to i32
      %c0_i32_42 = arith.constant 0 : i32
      %46 = arith.cmpi ne, %45, %c0_i32_42 : i32
      scf.if %46 {
        %c0_i32_50 = arith.constant 0 : i32
        %56 = arith.addi %c0_i32_50, %arg6 : i32
        %c1_i32_51 = arith.constant 1 : i32
        %57 = arith.addi %56, %c1_i32_51 : i32
        %c64_i32 = arith.constant 64 : i32
        %58 = arith.muli %57, %c64_i32 : i32
        %59 = tpu.assume_multiple %58, 8 : i32
        %c1_i32_52 = arith.constant 1 : i32
        %60 = arith.subi %c1_i32_52, %37 : i32
        %c0_i32_53 = arith.constant 0 : i32
        %61 = tpu.memref_slice %arg1[%59, %c0_i32_53] : memref<288x128xf32, #tpu.memory_space<any>> -> memref<64x128xf32, #tpu.memory_space<any>>
        %c0_i32_54 = arith.constant 0 : i32
        %c0_i32_55 = arith.constant 0 : i32
        %62 = tpu.memref_slice %arg3[%60, %c0_i32_54, %c0_i32_55] : memref<2x64x128xf32, #tpu.memory_space<vmem>> -> memref<1x64x128xf32, #tpu.memory_space<vmem>>
        %63 = tpu.memref_squeeze %62 : memref<1x64x128xf32, #tpu.memory_space<vmem>> -> memref<64x128xf32, #tpu.memory_space<vmem>>
        %64 = tpu.memref_slice %arg4[%60] : memref<2x!tpu.dma_semaphore, #tpu.memory_space<semaphore_mem>> -> memref<1x!tpu.dma_semaphore, #tpu.memory_space<semaphore_mem>>
        %65 = tpu.memref_squeeze %64 : memref<1x!tpu.dma_semaphore, #tpu.memory_space<semaphore_mem>> -> memref<!tpu.dma_semaphore, #tpu.memory_space<semaphore_mem>>
        tpu.enqueue_dma source(%61 : memref<64x128xf32, #tpu.memory_space<any>>) target(%63 : memref<64x128xf32, #tpu.memory_space<vmem>>) target_semaphore(%65 : memref<!tpu.dma_semaphore, #tpu.memory_space<semaphore_mem>>)
      } else {
      }
      %47 = arith.index_cast %37 : i32 to index
      %c0_43 = arith.constant 0 : index
      %c0_44 = arith.constant 0 : index
      %48 = vector.load %arg3[%47, %c0_43, %c0_44] : memref<2x64x128xf32, #tpu.memory_space<vmem>>, vector<1x64x128xf32>
      %49 = vector.shape_cast %48 : vector<1x64x128xf32> to vector<64x128xf32>
      %c0_45 = arith.constant 0 : index
      %c0_46 = arith.constant 0 : index
      %50 = vector.load %arg5[%c0_45, %c0_46] : memref<8x128xf32, #tpu.memory_space<vmem>>, vector<8x128xf32>
      %51 = arith.mulf %49, %49 : vector<64x128xf32>
      %52 = vector.shape_cast %51 : vector<64x128xf32> to vector<8x8x128xf32>
      %cst_47 = arith.constant dense<0.000000e+00> : vector<8x128xf32>
      %53 = vector.multi_reduction <add>, %52, %cst_47 [0] : vector<8x8x128xf32> to vector<8x128xf32>
      %54 = arith.addf %50, %53 : vector<8x128xf32>
      %c0_48 = arith.constant 0 : index
      %c0_49 = arith.constant 0 : index
      %55 = vector.load %arg5[%c0_48, %c0_49] : memref<8x128xf32, #tpu.memory_space<vmem>>, vector<8x128xf32>
      tpu.vector_store %arg5[%c0_48, %c0_49], %54 {strides = array<i32>} : memref<8x128xf32, #tpu.memory_space<vmem>>, vector<8x128xf32>,
    }
    %c4_i32_7 = arith.constant 4 : i32
    %c0_i32_8 = arith.constant 0 : i32
    %c0_i32_9 = arith.constant 0 : i32
    %c256_i32 = arith.constant 256 : i32
    %c0_i32_10 = arith.constant 0 : i32
    %8 = tpu.memref_slice %arg1[%c256_i32, %c0_i32_10] : memref<288x128xf32, #tpu.memory_space<any>> -> memref<32x128xf32, #tpu.memory_space<any>>
    %c0_i32_11 = arith.constant 0 : i32
    %c0_i32_12 = arith.constant 0 : i32
    %9 = tpu.memref_slice %arg3[%c0_i32_8, %c0_i32_11, %c0_i32_12] : memref<2x64x128xf32, #tpu.memory_space<vmem>> -> memref<1x32x128xf32, #tpu.memory_space<vmem>>
    %10 = tpu.memref_squeeze %9 : memref<1x32x128xf32, #tpu.memory_space<vmem>> -> memref<32x128xf32, #tpu.memory_space<vmem>>
    %11 = tpu.memref_slice %arg4[%c0_i32_9] : memref<2x!tpu.dma_semaphore, #tpu.memory_space<semaphore_mem>> -> memref<1x!tpu.dma_semaphore, #tpu.memory_space<semaphore_mem>>
    %12 = tpu.memref_squeeze %11 : memref<1x!tpu.dma_semaphore, #tpu.memory_space<semaphore_mem>> -> memref<!tpu.dma_semaphore, #tpu.memory_space<semaphore_mem>>
    tpu.enqueue_dma source(%8 : memref<32x128xf32, #tpu.memory_space<any>>) target(%10 : memref<32x128xf32, #tpu.memory_space<vmem>>) target_semaphore(%12 : memref<!tpu.dma_semaphore, #tpu.memory_space<semaphore_mem>>)
    %c0_i32_13 = arith.constant 0 : i32
    %c0_i32_14 = arith.constant 0 : i32
    %c256_i32_15 = arith.constant 256 : i32
    %c0_i32_16 = arith.constant 0 : i32
    %13 = tpu.memref_slice %arg1[%c256_i32_15, %c0_i32_16] : memref<288x128xf32, #tpu.memory_space<any>> -> memref<32x128xf32, #tpu.memory_space<any>>
    %c0_i32_17 = arith.constant 0 : i32
    %c0_i32_18 = arith.constant 0 : i32
    %14 = tpu.memref_slice %arg3[%c0_i32_13, %c0_i32_17, %c0_i32_18] : memref<2x64x128xf32, #tpu.memory_space<vmem>> -> memref<1x32x128xf32, #tpu.memory_space<vmem>>
    %15 = tpu.memref_squeeze %14 : memref<1x32x128xf32, #tpu.memory_space<vmem>> -> memref<32x128xf32, #tpu.memory_space<vmem>>
    %16 = tpu.memref_slice %arg4[%c0_i32_14] : memref<2x!tpu.dma_semaphore, #tpu.memory_space<semaphore_mem>> -> memref<1x!tpu.dma_semaphore, #tpu.memory_space<semaphore_mem>>
    %17 = tpu.memref_squeeze %16 : memref<1x!tpu.dma_semaphore, #tpu.memory_space<semaphore_mem>> -> memref<!tpu.dma_semaphore, #tpu.memory_space<semaphore_mem>>
    tpu.wait_dma2 semaphore(%17 : memref<!tpu.dma_semaphore, #tpu.memory_space<semaphore_mem>>) src(%13 : memref<32x128xf32, #tpu.memory_space<any>>) dst(%15 : memref<32x128xf32, #tpu.memory_space<vmem>>)
    %c0_19 = arith.constant 0 : index
    %c0_20 = arith.constant 0 : index
    %c0_21 = arith.constant 0 : index
    %18 = vector.load %arg3[%c0_19, %c0_20, %c0_21] : memref<2x64x128xf32, #tpu.memory_space<vmem>>, vector<1x32x128xf32>
    %19 = vector.shape_cast %18 : vector<1x32x128xf32> to vector<32x128xf32>
    %c0_22 = arith.constant 0 : index
    %c0_23 = arith.constant 0 : index
    %20 = vector.load %arg5[%c0_22, %c0_23] : memref<8x128xf32, #tpu.memory_space<vmem>>, vector<8x128xf32>
    %21 = arith.mulf %19, %19 : vector<32x128xf32>
    %22 = vector.shape_cast %21 : vector<32x128xf32> to vector<4x8x128xf32>
    %cst_24 = arith.constant dense<0.000000e+00> : vector<8x128xf32>
    %23 = vector.multi_reduction <add>, %22, %cst_24 [0] : vector<4x8x128xf32> to vector<8x128xf32>
    %24 = arith.addf %20, %23 : vector<8x128xf32>
    %c0_25 = arith.constant 0 : index
    %c0_26 = arith.constant 0 : index
    %25 = vector.load %arg5[%c0_25, %c0_26] : memref<8x128xf32, #tpu.memory_space<vmem>>, vector<8x128xf32>
    tpu.vector_store %arg5[%c0_25, %c0_26], %24 {strides = array<i32>} : memref<8x128xf32, #tpu.memory_space<vmem>>, vector<8x128xf32>,
    %c0_27 = arith.constant 0 : index
    %c0_28 = arith.constant 0 : index
    %26 = vector.load %arg5[%c0_27, %c0_28] : memref<8x128xf32, #tpu.memory_space<vmem>>, vector<8x128xf32>
    %c0_29 = arith.constant 0 : index
    %c0_30 = arith.constant 0 : index
    %27 = vector.load %arg2[%c0_29, %c0_30] : memref<8x128xf32, #tpu.memory_space<vmem>>, vector<8x128xf32>
    tpu.vector_store %arg2[%c0_29, %c0_30], %26 {strides = array<i32>} : memref<8x128xf32, #tpu.memory_space<vmem>>, vector<8x128xf32>,
    return
  }
  func.func @transform_1(%arg0: i32) -> (i32, i32) {
    %c0_i32 = arith.constant 0 : i32
    %c0_i32_0 = arith.constant 0 : i32
    return %arg0, %c0_i32 : i32, i32
  }
}

module attributes {stable_mosaic.version = 11 : i64} {
  func.func @kernel(%arg0: i32, %arg1: memref<144x128xbf16, #tpu.memory_space<any>>, %arg2: memref<8x128xf32, #tpu.memory_space<vmem>>, %arg3: memref<2x64x128xbf16, #tpu.memory_space<vmem>>, %arg4: memref<2x!tpu.dma_semaphore, #tpu.memory_space<semaphore_mem>>, %arg5: memref<8x128xf32, #tpu.memory_space<vmem>>) attributes {dimension_semantics = [#tpu.dimension_semantics<arbitrary>], iteration_bounds = array<i64: 1>, scalar_prefetch = 0 : i64, scratch_operands = 3 : i64, tpu.core_type = #tpu.core_type<tc>, window_params = [{}, {transform_indices = @transform_1, window_bounds = array<i64: 8, 128>}]} {
    %cst = arith.constant 0.000000e+00 : f32
    %0 = vector.broadcast %cst : f32 to vector<8x128xf32>
    %c0 = arith.constant 0 : index
    %c0_0 = arith.constant 0 : index
    %1 = vector.load %arg5[%c0, %c0_0] : memref<8x128xf32, #tpu.memory_space<vmem>>, vector<8x128xf32>
    tpu.vector_store %arg5[%c0, %c0_0], %0 {strides = array<i32>} : memref<8x128xf32, #tpu.memory_space<vmem>>, vector<8x128xf32>,
    %c0_i32 = arith.constant 0 : i32
    %c0_i32_1 = arith.constant 0 : i32
    %c0_i32_2 = arith.constant 0 : i32
    %c0_i32_3 = arith.constant 0 : i32
    %2 = tpu.memref_slice %arg1[%c0_i32_2, %c0_i32_3] : memref<144x128xbf16, #tpu.memory_space<any>> -> memref<64x128xbf16, #tpu.memory_space<any>>
    %c0_i32_4 = arith.constant 0 : i32
    %c0_i32_5 = arith.constant 0 : i32
    %3 = tpu.memref_slice %arg3[%c0_i32, %c0_i32_4, %c0_i32_5] : memref<2x64x128xbf16, #tpu.memory_space<vmem>> -> memref<1x64x128xbf16, #tpu.memory_space<vmem>>
    %4 = tpu.memref_squeeze %3 : memref<1x64x128xbf16, #tpu.memory_space<vmem>> -> memref<64x128xbf16, #tpu.memory_space<vmem>>
    %5 = tpu.memref_slice %arg4[%c0_i32_1] : memref<2x!tpu.dma_semaphore, #tpu.memory_space<semaphore_mem>> -> memref<1x!tpu.dma_semaphore, #tpu.memory_space<semaphore_mem>>
    %6 = tpu.memref_squeeze %5 : memref<1x!tpu.dma_semaphore, #tpu.memory_space<semaphore_mem>> -> memref<!tpu.dma_semaphore, #tpu.memory_space<semaphore_mem>>
    tpu.enqueue_dma source(%2 : memref<64x128xbf16, #tpu.memory_space<any>>) target(%4 : memref<64x128xbf16, #tpu.memory_space<vmem>>) target_semaphore(%6 : memref<!tpu.dma_semaphore, #tpu.memory_space<semaphore_mem>>)
    %c0_i32_6 = arith.constant 0 : i32
    %c2_i32 = arith.constant 2 : i32
    %7 = arith.addi %c0_i32_6, %c2_i32 : i32
    %c1_i32 = arith.constant 1 : i32
    scf.for %arg6 = %c0_i32_6 to %7 step %c1_i32  : i32 {
      %c2_i32_31 = arith.constant 2 : i32
      %c0_i32_32 = arith.constant 0 : i32
      %29 = arith.cmpi eq, %c2_i32_31, %c0_i32_32 : i32
      %c1_i32_33 = arith.constant 1 : i32
      %30 = arith.select %29, %c1_i32_33, %c2_i32_31 : i32
      %31 = arith.remsi %arg6, %30 : i32
      %c0_i32_34 = arith.constant 0 : i32
      %32 = arith.cmpi ne, %31, %c0_i32_34 : i32
      %c0_i32_35 = arith.constant 0 : i32
      %33 = arith.cmpi slt, %31, %c0_i32_35 : i32
      %c0_i32_36 = arith.constant 0 : i32
      %34 = arith.cmpi slt, %30, %c0_i32_36 : i32
      %35 = arith.xori %33, %34 : i1
      %36 = arith.andi %35, %32 : i1
      %37 = arith.addi %31, %30 : i32
      %38 = arith.select %36, %37, %31 : i32
      %c0_i32_37 = arith.constant 0 : i32
      %c0_i32_38 = arith.constant 0 : i32
      %39 = tpu.memref_slice %arg1[%c0_i32_37, %c0_i32_38] : memref<144x128xbf16, #tpu.memory_space<any>> -> memref<64x128xbf16, #tpu.memory_space<any>>
      %c0_i32_39 = arith.constant 0 : i32
      %c0_i32_40 = arith.constant 0 : i32
      %40 = tpu.memref_slice %arg3[%38, %c0_i32_39, %c0_i32_40] : memref<2x64x128xbf16, #tpu.memory_space<vmem>> -> memref<1x64x128xbf16, #tpu.memory_space<vmem>>
      %41 = tpu.memref_squeeze %40 : memref<1x64x128xbf16, #tpu.memory_space<vmem>> -> memref<64x128xbf16, #tpu.memory_space<vmem>>
      %42 = tpu.memref_slice %arg4[%38] : memref<2x!tpu.dma_semaphore, #tpu.memory_space<semaphore_mem>> -> memref<1x!tpu.dma_semaphore, #tpu.memory_space<semaphore_mem>>
      %43 = tpu.memref_squeeze %42 : memref<1x!tpu.dma_semaphore, #tpu.memory_space<semaphore_mem>> -> memref<!tpu.dma_semaphore, #tpu.memory_space<semaphore_mem>>
      tpu.wait_dma2 semaphore(%43 : memref<!tpu.dma_semaphore, #tpu.memory_space<semaphore_mem>>) src(%39 : memref<64x128xbf16, #tpu.memory_space<any>>) dst(%41 : memref<64x128xbf16, #tpu.memory_space<vmem>>)
      %c1_i32_41 = arith.constant 1 : i32
      %44 = arith.addi %arg6, %c1_i32_41 : i32
      %c2_i32_42 = arith.constant 2 : i32
      %45 = arith.cmpi slt, %44, %c2_i32_42 : i32
      %46 = arith.extui %45 : i1 to i32
      %c0_i32_43 = arith.constant 0 : i32
      %47 = arith.cmpi ne, %46, %c0_i32_43 : i32
      scf.if %47 {
        %c0_i32_51 = arith.constant 0 : i32
        %58 = arith.addi %c0_i32_51, %arg6 : i32
        %c1_i32_52 = arith.constant 1 : i32
        %59 = arith.addi %58, %c1_i32_52 : i32
        %c64_i32 = arith.constant 64 : i32
        %60 = arith.muli %59, %c64_i32 : i32
        %61 = tpu.assume_multiple %60, 8 : i32
        %c1_i32_53 = arith.constant 1 : i32
        %62 = arith.subi %c1_i32_53, %38 : i32
        %c0_i32_54 = arith.constant 0 : i32
        %63 = tpu.memref_slice %arg1[%61, %c0_i32_54] : memref<144x128xbf16, #tpu.memory_space<any>> -> memref<64x128xbf16, #tpu.memory_space<any>>
        %c0_i32_55 = arith.constant 0 : i32
        %c0_i32_56 = arith.constant 0 : i32
        %64 = tpu.memref_slice %arg3[%62, %c0_i32_55, %c0_i32_56] : memref<2x64x128xbf16, #tpu.memory_space<vmem>> -> memref<1x64x128xbf16, #tpu.memory_space<vmem>>
        %65 = tpu.memref_squeeze %64 : memref<1x64x128xbf16, #tpu.memory_space<vmem>> -> memref<64x128xbf16, #tpu.memory_space<vmem>>
        %66 = tpu.memref_slice %arg4[%62] : memref<2x!tpu.dma_semaphore, #tpu.memory_space<semaphore_mem>> -> memref<1x!tpu.dma_semaphore, #tpu.memory_space<semaphore_mem>>
        %67 = tpu.memref_squeeze %66 : memref<1x!tpu.dma_semaphore, #tpu.memory_space<semaphore_mem>> -> memref<!tpu.dma_semaphore, #tpu.memory_space<semaphore_mem>>
        tpu.enqueue_dma source(%63 : memref<64x128xbf16, #tpu.memory_space<any>>) target(%65 : memref<64x128xbf16, #tpu.memory_space<vmem>>) target_semaphore(%67 : memref<!tpu.dma_semaphore, #tpu.memory_space<semaphore_mem>>)
      } else {
      }
      %48 = arith.index_cast %38 : i32 to index
      %c0_44 = arith.constant 0 : index
      %c0_45 = arith.constant 0 : index
      %49 = vector.load %arg3[%48, %c0_44, %c0_45] : memref<2x64x128xbf16, #tpu.memory_space<vmem>>, vector<1x64x128xbf16>
      %50 = vector.shape_cast %49 : vector<1x64x128xbf16> to vector<64x128xbf16>
      %51 = arith.extf %50 : vector<64x128xbf16> to vector<64x128xf32>
      %c0_46 = arith.constant 0 : index
      %c0_47 = arith.constant 0 : index
      %52 = vector.load %arg5[%c0_46, %c0_47] : memref<8x128xf32, #tpu.memory_space<vmem>>, vector<8x128xf32>
      %53 = arith.mulf %51, %51 : vector<64x128xf32>
      %54 = vector.shape_cast %53 : vector<64x128xf32> to vector<8x8x128xf32>
      %cst_48 = arith.constant dense<0.000000e+00> : vector<8x128xf32>
      %55 = vector.multi_reduction <add>, %54, %cst_48 [0] : vector<8x8x128xf32> to vector<8x128xf32>
      %56 = arith.addf %52, %55 : vector<8x128xf32>
      %c0_49 = arith.constant 0 : index
      %c0_50 = arith.constant 0 : index
      %57 = vector.load %arg5[%c0_49, %c0_50] : memref<8x128xf32, #tpu.memory_space<vmem>>, vector<8x128xf32>
      tpu.vector_store %arg5[%c0_49, %c0_50], %56 {strides = array<i32>} : memref<8x128xf32, #tpu.memory_space<vmem>>, vector<8x128xf32>,
    }
    %c2_i32_7 = arith.constant 2 : i32
    %c0_i32_8 = arith.constant 0 : i32
    %c0_i32_9 = arith.constant 0 : i32
    %c128_i32 = arith.constant 128 : i32
    %c0_i32_10 = arith.constant 0 : i32
    %8 = tpu.memref_slice %arg1[%c128_i32, %c0_i32_10] : memref<144x128xbf16, #tpu.memory_space<any>> -> memref<16x128xbf16, #tpu.memory_space<any>>
    %c0_i32_11 = arith.constant 0 : i32
    %c0_i32_12 = arith.constant 0 : i32
    %9 = tpu.memref_slice %arg3[%c0_i32_8, %c0_i32_11, %c0_i32_12] : memref<2x64x128xbf16, #tpu.memory_space<vmem>> -> memref<1x16x128xbf16, #tpu.memory_space<vmem>>
    %10 = tpu.memref_squeeze %9 : memref<1x16x128xbf16, #tpu.memory_space<vmem>> -> memref<16x128xbf16, #tpu.memory_space<vmem>>
    %11 = tpu.memref_slice %arg4[%c0_i32_9] : memref<2x!tpu.dma_semaphore, #tpu.memory_space<semaphore_mem>> -> memref<1x!tpu.dma_semaphore, #tpu.memory_space<semaphore_mem>>
    %12 = tpu.memref_squeeze %11 : memref<1x!tpu.dma_semaphore, #tpu.memory_space<semaphore_mem>> -> memref<!tpu.dma_semaphore, #tpu.memory_space<semaphore_mem>>
    tpu.enqueue_dma source(%8 : memref<16x128xbf16, #tpu.memory_space<any>>) target(%10 : memref<16x128xbf16, #tpu.memory_space<vmem>>) target_semaphore(%12 : memref<!tpu.dma_semaphore, #tpu.memory_space<semaphore_mem>>)
    %c0_i32_13 = arith.constant 0 : i32
    %c0_i32_14 = arith.constant 0 : i32
    %c128_i32_15 = arith.constant 128 : i32
    %c0_i32_16 = arith.constant 0 : i32
    %13 = tpu.memref_slice %arg1[%c128_i32_15, %c0_i32_16] : memref<144x128xbf16, #tpu.memory_space<any>> -> memref<16x128xbf16, #tpu.memory_space<any>>
    %c0_i32_17 = arith.constant 0 : i32
    %c0_i32_18 = arith.constant 0 : i32
    %14 = tpu.memref_slice %arg3[%c0_i32_13, %c0_i32_17, %c0_i32_18] : memref<2x64x128xbf16, #tpu.memory_space<vmem>> -> memref<1x16x128xbf16, #tpu.memory_space<vmem>>
    %15 = tpu.memref_squeeze %14 : memref<1x16x128xbf16, #tpu.memory_space<vmem>> -> memref<16x128xbf16, #tpu.memory_space<vmem>>
    %16 = tpu.memref_slice %arg4[%c0_i32_14] : memref<2x!tpu.dma_semaphore, #tpu.memory_space<semaphore_mem>> -> memref<1x!tpu.dma_semaphore, #tpu.memory_space<semaphore_mem>>
    %17 = tpu.memref_squeeze %16 : memref<1x!tpu.dma_semaphore, #tpu.memory_space<semaphore_mem>> -> memref<!tpu.dma_semaphore, #tpu.memory_space<semaphore_mem>>
    tpu.wait_dma2 semaphore(%17 : memref<!tpu.dma_semaphore, #tpu.memory_space<semaphore_mem>>) src(%13 : memref<16x128xbf16, #tpu.memory_space<any>>) dst(%15 : memref<16x128xbf16, #tpu.memory_space<vmem>>)
    %c0_19 = arith.constant 0 : index
    %c0_20 = arith.constant 0 : index
    %c0_21 = arith.constant 0 : index
    %18 = vector.load %arg3[%c0_19, %c0_20, %c0_21] : memref<2x64x128xbf16, #tpu.memory_space<vmem>>, vector<1x16x128xbf16>
    %19 = vector.shape_cast %18 : vector<1x16x128xbf16> to vector<16x128xbf16>
    %20 = arith.extf %19 : vector<16x128xbf16> to vector<16x128xf32>
    %c0_22 = arith.constant 0 : index
    %c0_23 = arith.constant 0 : index
    %21 = vector.load %arg5[%c0_22, %c0_23] : memref<8x128xf32, #tpu.memory_space<vmem>>, vector<8x128xf32>
    %22 = arith.mulf %20, %20 : vector<16x128xf32>
    %23 = vector.shape_cast %22 : vector<16x128xf32> to vector<2x8x128xf32>
    %cst_24 = arith.constant dense<0.000000e+00> : vector<8x128xf32>
    %24 = vector.multi_reduction <add>, %23, %cst_24 [0] : vector<2x8x128xf32> to vector<8x128xf32>
    %25 = arith.addf %21, %24 : vector<8x128xf32>
    %c0_25 = arith.constant 0 : index
    %c0_26 = arith.constant 0 : index
    %26 = vector.load %arg5[%c0_25, %c0_26] : memref<8x128xf32, #tpu.memory_space<vmem>>, vector<8x128xf32>
    tpu.vector_store %arg5[%c0_25, %c0_26], %25 {strides = array<i32>} : memref<8x128xf32, #tpu.memory_space<vmem>>, vector<8x128xf32>,
    %c0_27 = arith.constant 0 : index
    %c0_28 = arith.constant 0 : index
    %27 = vector.load %arg5[%c0_27, %c0_28] : memref<8x128xf32, #tpu.memory_space<vmem>>, vector<8x128xf32>
    %c0_29 = arith.constant 0 : index
    %c0_30 = arith.constant 0 : index
    %28 = vector.load %arg2[%c0_29, %c0_30] : memref<8x128xf32, #tpu.memory_space<vmem>>, vector<8x128xf32>
    tpu.vector_store %arg2[%c0_29, %c0_30], %27 {strides = array<i32>} : memref<8x128xf32, #tpu.memory_space<vmem>>, vector<8x128xf32>,
    return
  }
  func.func @transform_1(%arg0: i32) -> (i32, i32) {
    %c0_i32 = arith.constant 0 : i32
    %c0_i32_0 = arith.constant 0 : i32
    return %arg0, %c0_i32 : i32, i32
  }
}

</mosaic_0001>

<llo_original>
// kernel: _lambda_.2
$region0: #{_lambda_.2}
  #allocation0 [shape = 'u32[]', space=smem, size = 0x4, offset = 0x4, fixed_abs, tag = 'smem constant byte address 0x4 - core index']
  #allocation1 [shape = 'u32[144,128]{1,0:T(1,128)}', space=vmem, size = 0x12000, scoped, tag = 'internal scratch']
  #allocation2 [shape = 'f32[2,64,128]{2,1,0:T(8,128)}', space=vmem, size = 0x10000, scoped, tag = 'scratch operand']
  #allocation3 [shape = 's32[2]{0}', space=sflag, size = 0x8, scoped, tag = 'scratch operand']
  #allocation4 [shape = 'f32[8,128]{1,0:T(8,128)}', space=vmem, size = 0x1000, scoped, tag = 'scratch operand']
  #allocation5 [shape = 's32[]', space=sflag, size = 0x4, offset = 0, fixed_abs, tag = 'sflag constant byte address 0x0 - dummy sync flag']
  #allocation6 [shape = 's32[]', space=sflag, size = 0x4, offset = 0, fixed_abs, tag = 'sflag constant byte address 0x0 - dummy sync flag']
  #allocation7 [shape = 's32[]', space=sflag, size = 0x4, offset = 0, fixed_abs, tag = 'sflag constant byte address 0x0 - dummy sync flag']
  %s0 = inlined_call_operand.vmem [shape: f32[288,128], index: 0, kind: input, shape index: {}]
  %s1 = inlined_call_operand.vmem [shape: f32[8,128], index: 1, kind: output, shape index: {}]
  %s2 = sld [smem:[#allocation0]]
  $region123: #{_lambda_.2} parent=0
    _
  %s4 = ssub.s32 1, %s2
  %s5 = scalar_select 0, %s4, %s2
  %6 = vst [vmem:[#allocation4] sm:$0xff] 0.0
  %p8 = scmp.lt.u32.totalorder 64, 8
  %p9 = pneg %p8
  // Predicated region
  $region2: #{_lambda_.2} parent=0 // pred_check
    _
  $region3: #{_lambda_.2} parent=0 // pred_check_branch
    %11 = sbr.rel (%p8) target = $region5
  $region4: #{_lambda_.2} parent=0 // pred_region
    %s26 = sand.u32 64, 7
    %p27 = scmp.eq.s32.totalorder %s26, 0
    // Predicated region
    $region17: #{_lambda_.2} parent=4 // pred_check
      %p28 = pneg %p27
    $region18: #{_lambda_.2} parent=4 // pred_check_branch
      %30 = sbr.rel (%p28) target = $region20
    $region19: #{_lambda_.2} parent=4 // pred_region
      loop: start=0, step=1, limit=1
      $region21: #{_lambda_.2} parent=19 // loop_pre_header
        _
      $region22: #{_lambda_.2} parent=19 // loop_header
        %s32 = sphi 0, %s36
        %p33 = scmp.ge.s32.totalorder %s32, 1
        %s37 = sphi %s0, %s0
        %s38 = sphi [#allocation2], [#allocation2]
      $region23: #{_lambda_.2} parent=19 // loop_header_branch
        %35 = sbr.rel (%p33) target = $region27
      $region24: #{_lambda_.2} parent=19 // loop_body
        %v39 = vld [vmem:[%s37] sm:$0xff]
        %40 = vst [vmem:[%s38] sm:$0xff] %v39
        %v41 = vld [vmem:[%s37 + $0x8] sm:$0xff]
        %42 = vst [vmem:[%s38 + $0x8] sm:$0xff] %v41
        %v43 = vld [vmem:[%s37 + $0x10] sm:$0xff]
        %44 = vst [vmem:[%s38 + $0x10] sm:$0xff] %v43
        %v45 = vld [vmem:[%s37 + $0x18] sm:$0xff]
        %46 = vst [vmem:[%s38 + $0x18] sm:$0xff] %v45
        %v47 = vld [vmem:[%s37 + $0x20] sm:$0xff]
        %48 = vst [vmem:[%s38 + $0x20] sm:$0xff] %v47
        %v49 = vld [vmem:[%s37 + $0x28] sm:$0xff]
        %50 = vst [vmem:[%s38 + $0x28] sm:$0xff] %v49
        %v51 = vld [vmem:[%s37 + $0x30] sm:$0xff]
        %52 = vst [vmem:[%s38 + $0x30] sm:$0xff] %v51
        %v53 = vld [vmem:[%s37 + $0x38] sm:$0xff]
        %54 = vst [vmem:[%s38 + $0x38] sm:$0xff] %v53
      $region25: #{_lambda_.2} parent=19 // loop_footer
        %s36 = sadd.s32 1, %s32
      $region26: #{_lambda_.2} parent=19 // loop_footer_branch
        %31 = sbr.rel target = $region22
      $region27: #{_lambda_.2} parent=19 // loop_exit
        _
    $region20: #{_lambda_.2} parent=4 // pred_fallthru
      _
    %p55 = pneg %p27
    // Predicated region
    $region28: #{_lambda_.2} parent=4 // pred_check
      _
    $region29: #{_lambda_.2} parent=4 // pred_check_branch
      %57 = sbr.rel (%p27) target = $region31
    $region30: #{_lambda_.2} parent=4 // pred_region
      %s58 = sand.u32 64, 7
    $region31: #{_lambda_.2} parent=4 // pred_fallthru
      _
  $region5: #{_lambda_.2} parent=0 // pred_fallthru
    _
  // Predicated region
  $region6: #{_lambda_.2} parent=0 // pred_check
    %p12 = pneg %p8
  $region7: #{_lambda_.2} parent=0 // pred_check_branch
    %14 = sbr.rel (%p12) target = $region9
  $region8: #{_lambda_.2} parent=0 // pred_region
    %s15 = sshllo.u32 0, 64
    loop: start=0, step=1, limit=1
    $region10: #{_lambda_.2} parent=8 // loop_pre_header
      _
    $region11: #{_lambda_.2} parent=8 // loop_header
      %s17 = sphi 0, %s21
      %p18 = scmp.ge.s32.totalorder %s17, 1
      %s22 = sphi %s0, %s0
      %s23 = sphi [#allocation2], [#allocation2]
    $region12: #{_lambda_.2} parent=8 // loop_header_branch
      %20 = sbr.rel (%p18) target = $region16
    $region13: #{_lambda_.2} parent=8 // loop_body
      %v24 = vld [vmem:[%s22] sm:%s15]
      %25 = vst [vmem:[%s23] sm:%s15] %v24
    $region14: #{_lambda_.2} parent=8 // loop_footer
      %s21 = sadd.s32 1, %s17
    $region15: #{_lambda_.2} parent=8 // loop_footer_branch
      %16 = sbr.rel target = $region11
    $region16: #{_lambda_.2} parent=8 // loop_exit
      _
  $region9: #{_lambda_.2} parent=0 // pred_fallthru
    _
  // Predicated region
  $region32: #{_lambda_.2} parent=0 // pred_check
    _
  $region33: #{_lambda_.2} parent=0 // pred_check_branch
    %61 = sbr.rel (0) target = $region35
  $region34: #{_lambda_.2} parent=0 // pred_region
    %62 = vsyncadd [#allocation3], 1024
  $region35: #{_lambda_.2} parent=0 // pred_fallthru
    _
  loop: start=0, step=1, limit=4
  $region36: #{_lambda_.2} parent=0 // loop_pre_header
    _
  $region37: #{_lambda_.2} parent=0 // loop_header
    %s64 = sphi 0, %s68
    %p65 = scmp.ge.s32.totalorder %s64, 4
  $region38: #{_lambda_.2} parent=0 // loop_header_branch
    %67 = sbr.rel (%p65) target = $region42
  $region39: #{_lambda_.2} parent=0 // loop_body
    %p69 = scmp.lt.s32.totalorder %s64, 0
    %s70 = ssub.s32 0, %s64
    %s71 = scalar_select %p69, %s70, %s64
    %s72 = sand.u32 %s71, 1
    %s73 = ssub.s32 0, %s72
    %s74 = scalar_select %p69, %s73, %s72
    %p75 = scmp.ne.s32.totalorder %s74, 0
    %p76 = scmp.lt.s32.totalorder %s74, 0
    %p77 = pnand %p76, %p75
    %p78 = pneg %p77
    %s79 = sadd.s32 %s74, 2
    %s80 = scalar_select %p78, %s79, %s74
    %s81 = smul.u32 %s80, 64
    %s82 = scalar_lea.vmem [#allocation2], %s81
    %s83 = scalar_lea.sflag [#allocation3], %s80
    %s84 = smul.u32 64, 1
    %s85 = sshll.u32 %s84, 4
    %86 = dma.done %s83, %s85
    %s87 = sadd.s32 %s64, 1
    %p88 = scmp.lt.s32.totalorder %s87, 4
    // Predicated region
    $region43: #{_lambda_.2} parent=39 // pred_check
      %p89 = pneg %p88
    $region44: #{_lambda_.2} parent=39 // pred_check_branch
      %91 = sbr.rel (%p89) target = $region46
    $region45: #{_lambda_.2} parent=39 // pred_region
      %s92 = smul.u32 %s87, 64
      %s93 = ssub.s32 1, %s80
      %s94 = scalar_lea.vmem %s0, %s92
      %s95 = smul.u32 %s93, 64
      %s96 = scalar_lea.vmem [#allocation2], %s95
      %s97 = scalar_lea.sflag [#allocation3], %s93
      %p99 = scmp.lt.u32.totalorder 64, 8
      %p100 = pneg %p99
      // Predicated region
      $region47: #{_lambda_.2} parent=45 // pred_check
        _
      $region48: #{_lambda_.2} parent=45 // pred_check_branch
        %102 = sbr.rel (%p99) target = $region50
      $region49: #{_lambda_.2} parent=45 // pred_region
        %s117 = sand.u32 64, 7
        %p118 = scmp.eq.s32.totalorder %s117, 0
        // Predicated region
        $region62: #{_lambda_.2} parent=49 // pred_check
          %p119 = pneg %p118
        $region63: #{_lambda_.2} parent=49 // pred_check_branch
          %121 = sbr.rel (%p119) target = $region65
        $region64: #{_lambda_.2} parent=49 // pred_region
          loop: start=0, step=1, limit=1
          $region66: #{_lambda_.2} parent=64 // loop_pre_header
            _
          $region67: #{_lambda_.2} parent=64 // loop_header
            %s123 = sphi 0, %s127
            %p124 = scmp.ge.s32.totalorder %s123, 1
            %s128 = sphi %s94, %s94
            %s129 = sphi %s96, %s96
          $region68: #{_lambda_.2} parent=64 // loop_header_branch
            %126 = sbr.rel (%p124) target = $region72
          $region69: #{_lambda_.2} parent=64 // loop_body
            %v130 = vld [vmem:[%s128] sm:$0xff]
            %131 = vst [vmem:[%s129] sm:$0xff] %v130
            %v132 = vld [vmem:[%s128 + $0x8] sm:$0xff]
            %133 = vst [vmem:[%s129 + $0x8] sm:$0xff] %v132
            %v134 = vld [vmem:[%s128 + $0x10] sm:$0xff]
            %135 = vst [vmem:[%s129 + $0x10] sm:$0xff] %v134
            %v136 = vld [vmem:[%s128 + $0x18] sm:$0xff]
            %137 = vst [vmem:[%s129 + $0x18] sm:$0xff] %v136
            %v138 = vld [vmem:[%s128 + $0x20] sm:$0xff]
            %139 = vst [vmem:[%s129 + $0x20] sm:$0xff] %v138
            %v140 = vld [vmem:[%s128 + $0x28] sm:$0xff]
            %141 = vst [vmem:[%s129 + $0x28] sm:$0xff] %v140
            %v142 = vld [vmem:[%s128 + $0x30] sm:$0xff]
            %143 = vst [vmem:[%s129 + $0x30] sm:$0xff] %v142
            %v144 = vld [vmem:[%s128 + $0x38] sm:$0xff]
            %145 = vst [vmem:[%s129 + $0x38] sm:$0xff] %v144
          $region70: #{_lambda_.2} parent=64 // loop_footer
            %s127 = sadd.s32 1, %s123
          $region71: #{_lambda_.2} parent=64 // loop_footer_branch
            %122 = sbr.rel target = $region67
          $region72: #{_lambda_.2} parent=64 // loop_exit
            _
        $region65: #{_lambda_.2} parent=49 // pred_fallthru
          _
        %p146 = pneg %p118
        // Predicated region
        $region73: #{_lambda_.2} parent=49 // pred_check
          _
        $region74: #{_lambda_.2} parent=49 // pred_check_branch
          %148 = sbr.rel (%p118) target = $region76
        $region75: #{_lambda_.2} parent=49 // pred_region
          %s149 = sand.u32 64, 7
        $region76: #{_lambda_.2} parent=49 // pred_fallthru
          _
      $region50: #{_lambda_.2} parent=45 // pred_fallthru
        _
      // Predicated region
      $region51: #{_lambda_.2} parent=45 // pred_check
        %p103 = pneg %p99
      $region52: #{_lambda_.2} parent=45 // pred_check_branch
        %105 = sbr.rel (%p103) target = $region54
      $region53: #{_lambda_.2} parent=45 // pred_region
        %s106 = sshllo.u32 0, 64
        loop: start=0, step=1, limit=1
        $region55: #{_lambda_.2} parent=53 // loop_pre_header
          _
        $region56: #{_lambda_.2} parent=53 // loop_header
          %s108 = sphi 0, %s112
          %p109 = scmp.ge.s32.totalorder %s108, 1
          %s113 = sphi %s94, %s94
          %s114 = sphi %s96, %s96
        $region57: #{_lambda_.2} parent=53 // loop_header_branch
          %111 = sbr.rel (%p109) target = $region61
        $region58: #{_lambda_.2} parent=53 // loop_body
          %v115 = vld [vmem:[%s113] sm:%s106]
          %116 = vst [vmem:[%s114] sm:%s106] %v115
        $region59: #{_lambda_.2} parent=53 // loop_footer
          %s112 = sadd.s32 1, %s108
        $region60: #{_lambda_.2} parent=53 // loop_footer_branch
          %107 = sbr.rel target = $region56
        $region61: #{_lambda_.2} parent=53 // loop_exit
          _
      $region54: #{_lambda_.2} parent=45 // pred_fallthru
        _
      // Predicated region
      $region77: #{_lambda_.2} parent=45 // pred_check
        _
      $region78: #{_lambda_.2} parent=45 // pred_check_branch
        %152 = sbr.rel (0) target = $region80
      $region79: #{_lambda_.2} parent=45 // pred_region
        %153 = vsyncadd %s97, 1024
      $region80: #{_lambda_.2} parent=45 // pred_fallthru
        _
    $region46: #{_lambda_.2} parent=39 // pred_fallthru
      _
    %v154 = vld [vmem:[%s82] sm:$0xff]
    %v155 = vld [vmem:[%s82 + $0x8] sm:$0xff]
    %v156 = vld [vmem:[%s82 + $0x10] sm:$0xff]
    %v157 = vld [vmem:[%s82 + $0x18] sm:$0xff]
    %v158 = vld [vmem:[%s82 + $0x20] sm:$0xff]
    %v159 = vld [vmem:[%s82 + $0x28] sm:$0xff]
    %v160 = vld [vmem:[%s82 + $0x30] sm:$0xff]
    %v161 = vld [vmem:[%s82 + $0x38] sm:$0xff]
    %v162 = vld [vmem:[#allocation4] sm:$0xff]
    %v163 = vmul.f32 %v154, %v154
    %v164 = vmul.f32 %v155, %v155
    %v165 = vmul.f32 %v156, %v156
    %v166 = vmul.f32 %v157, %v157
    %v167 = vmul.f32 %v158, %v158
    %v168 = vmul.f32 %v159, %v159
    %v169 = vmul.f32 %v160, %v160
    %v170 = vmul.f32 %v161, %v161
    %v171 = vadd.f32 %v163, %v164
    %v172 = vadd.f32 %v171, %v165
    %v173 = vadd.f32 %v172, %v166
    %v174 = vadd.f32 %v173, %v167
    %v175 = vadd.f32 %v174, %v168
    %v176 = vadd.f32 %v175, %v169
    %v177 = vadd.f32 %v176, %v170
    %v178 = vadd.f32 %v162, %v177
    %179 = vst [vmem:[#allocation4] sm:$0xff] %v178
  $region40: #{_lambda_.2} parent=0 // loop_footer
    %s68 = sadd.s32 1, %s64
  $region41: #{_lambda_.2} parent=0 // loop_footer_branch
    %63 = sbr.rel target = $region37
  $region42: #{_lambda_.2} parent=0 // loop_exit
    _
  %s180 = scalar_lea.vmem %s0, 256
  %p182 = scmp.lt.u32.totalorder 32, 8
  %p183 = pneg %p182
  // Predicated region
  $region81: #{_lambda_.2} parent=0 // pred_check
    _
  $region82: #{_lambda_.2} parent=0 // pred_check_branch
    %185 = sbr.rel (%p182) target = $region84
  $region83: #{_lambda_.2} parent=0 // pred_region
    %s200 = sand.u32 32, 7
    %p201 = scmp.eq.s32.totalorder %s200, 0
    // Predicated region
    $region96: #{_lambda_.2} parent=83 // pred_check
      %p202 = pneg %p201
    $region97: #{_lambda_.2} parent=83 // pred_check_branch
      %204 = sbr.rel (%p202) target = $region99
    $region98: #{_lambda_.2} parent=83 // pred_region
      loop: start=0, step=1, limit=1
      $region100: #{_lambda_.2} parent=98 // loop_pre_header
        _
      $region101: #{_lambda_.2} parent=98 // loop_header
        %s206 = sphi 0, %s210
        %p207 = scmp.ge.s32.totalorder %s206, 1
        %s211 = sphi %s180, %s180
        %s212 = sphi [#allocation2], [#allocation2]
      $region102: #{_lambda_.2} parent=98 // loop_header_branch
        %209 = sbr.rel (%p207) target = $region106
      $region103: #{_lambda_.2} parent=98 // loop_body
        %v213 = vld [vmem:[%s211] sm:$0xff]
        %214 = vst [vmem:[%s212] sm:$0xff] %v213
        %v215 = vld [vmem:[%s211 + $0x8] sm:$0xff]
        %216 = vst [vmem:[%s212 + $0x8] sm:$0xff] %v215
        %v217 = vld [vmem:[%s211 + $0x10] sm:$0xff]
        %218 = vst [vmem:[%s212 + $0x10] sm:$0xff] %v217
        %v219 = vld [vmem:[%s211 + $0x18] sm:$0xff]
        %220 = vst [vmem:[%s212 + $0x18] sm:$0xff] %v219
      $region104: #{_lambda_.2} parent=98 // loop_footer
        %s210 = sadd.s32 1, %s206
      $region105: #{_lambda_.2} parent=98 // loop_footer_branch
        %205 = sbr.rel target = $region101
      $region106: #{_lambda_.2} parent=98 // loop_exit
        _
    $region99: #{_lambda_.2} parent=83 // pred_fallthru
      _
    %p221 = pneg %p201
    // Predicated region
    $region107: #{_lambda_.2} parent=83 // pred_check
      _
    $region108: #{_lambda_.2} parent=83 // pred_check_branch
      %223 = sbr.rel (%p201) target = $region110
    $region109: #{_lambda_.2} parent=83 // pred_region
      %s224 = sand.u32 32, 7
    $region110: #{_lambda_.2} parent=83 // pred_fallthru
      _
  $region84: #{_lambda_.2} parent=0 // pred_fallthru
    _
  // Predicated region
  $region85: #{_lambda_.2} parent=0 // pred_check
    %p186 = pneg %p182
  $region86: #{_lambda_.2} parent=0 // pred_check_branch
    %188 = sbr.rel (%p186) target = $region88
  $region87: #{_lambda_.2} parent=0 // pred_region
    %s189 = sshllo.u32 0, 32
    loop: start=0, step=1, limit=1
    $region89: #{_lambda_.2} parent=87 // loop_pre_header
      _
    $region90: #{_lambda_.2} parent=87 // loop_header
      %s191 = sphi 0, %s195
      %p192 = scmp.ge.s32.totalorder %s191, 1
      %s196 = sphi %s180, %s180
      %s197 = sphi [#allocation2], [#allocation2]
    $region91: #{_lambda_.2} parent=87 // loop_header_branch
      %194 = sbr.rel (%p192) target = $region95
    $region92: #{_lambda_.2} parent=87 // loop_body
      %v198 = vld [vmem:[%s196] sm:%s189]
      %199 = vst [vmem:[%s197] sm:%s189] %v198
    $region93: #{_lambda_.2} parent=87 // loop_footer
      %s195 = sadd.s32 1, %s191
    $region94: #{_lambda_.2} parent=87 // loop_footer_branch
      %190 = sbr.rel target = $region90
    $region95: #{_lambda_.2} parent=87 // loop_exit
      _
  $region88: #{_lambda_.2} parent=0 // pred_fallthru
    _
  // Predicated region
  $region111: #{_lambda_.2} parent=0 // pred_check
    _
  $region112: #{_lambda_.2} parent=0 // pred_check_branch
    %227 = sbr.rel (0) target = $region114
  $region113: #{_lambda_.2} parent=0 // pred_region
    %228 = vsyncadd [#allocation3], 512
  $region114: #{_lambda_.2} parent=0 // pred_fallthru
    _
  %s229 = smul.u32 32, 1
  %s230 = sshll.u32 %s229, 4
  %231 = dma.done [#allocation3], %s230
  %v232 = vld [vmem:[#allocation2] sm:$0xff]
  %v233 = vld [vmem:[#allocation2 + $0x8] sm:$0xff]
  %v234 = vld [vmem:[#allocation2 + $0x10] sm:$0xff]
  %v235 = vld [vmem:[#allocation2 + $0x18] sm:$0xff]
  %v236 = vld [vmem:[#allocation4] sm:$0xff]
  %v237 = vmul.f32 %v232, %v232
  %v238 = vmul.f32 %v233, %v233
  %v239 = vmul.f32 %v234, %v234
  %v240 = vmul.f32 %v235, %v235
  %v241 = vadd.f32 %v237, %v238
  %v242 = vadd.f32 %v241, %v239
  %v243 = vadd.f32 %v242, %v240
  %v244 = vadd.f32 %v236, %v243
  %245 = vst [vmem:[#allocation4] sm:$0xff] %v244
  %v246 = vld [vmem:[#allocation4] sm:$0xff]
  %247 = vst [vmem:[%s1] sm:$0xff] %v246
  // Predicated region
  $region115: #{_lambda_.2} parent=0 // pred_check
    _
  $region116: #{_lambda_.2} parent=0 // pred_check_branch
    %249 = sbr.rel (0) target = $region118
  $region117: #{_lambda_.2} parent=0 // pred_region
    _
  $region118: #{_lambda_.2} parent=0 // pred_fallthru
    _
  // Predicated region
  $region119: #{_lambda_.2} parent=0 // pred_check
    _
  $region120: #{_lambda_.2} parent=0 // pred_check_branch
    %251 = sbr.rel (0) target = $region122
  $region121: #{_lambda_.2} parent=0 // pred_region
    _
  $region122: #{_lambda_.2} parent=0 // pred_fallthru
    _
  %252 = vsyncmov [#allocation3]
  %s253 = vpop.sfrf %252
  %p254 = scmp.eq.s32.totalorder %s253, 0
  %p255 = pneg %p254
  %257 = shalt.err (%p255)
  %s258 = scalar_lea.sflag [#allocation3], 1
  %259 = vsyncmov %s258
  %s260 = vpop.sfrf %259
  %p261 = scmp.eq.s32.totalorder %s260, 0
  %p262 = pneg %p261
  %264 = shalt.err (%p262)

// kernel: _lambda_.3
$region0: #{_lambda_.3}
  #allocation0 [shape = 'u32[]', space=smem, size = 0x4, offset = 0x4, fixed_abs, tag = 'smem constant byte address 0x4 - core index']
  #allocation1 [shape = 'u32[144,128]{1,0:T(1,128)}', space=vmem, size = 0x12000, scoped, tag = 'internal scratch']
  #allocation2 [shape = 'bf16[2,64,128]{2,1,0:T(16,128)(2,1)}', space=vmem, size = 0x8000, scoped, tag = 'scratch operand']
  #allocation3 [shape = 's32[2]{0}', space=sflag, size = 0x8, scoped, tag = 'scratch operand']
  #allocation4 [shape = 'f32[8,128]{1,0:T(8,128)}', space=vmem, size = 0x1000, scoped, tag = 'scratch operand']
  #allocation5 [shape = 's32[]', space=sflag, size = 0x4, offset = 0, fixed_abs, tag = 'sflag constant byte address 0x0 - dummy sync flag']
  #allocation6 [shape = 's32[]', space=sflag, size = 0x4, offset = 0, fixed_abs, tag = 'sflag constant byte address 0x0 - dummy sync flag']
  #allocation7 [shape = 's32[]', space=sflag, size = 0x4, offset = 0, fixed_abs, tag = 'sflag constant byte address 0x0 - dummy sync flag']
  %s0 = inlined_call_operand.vmem [shape: bf16[144,128], index: 0, kind: input, shape index: {}]
  %s1 = inlined_call_operand.vmem [shape: f32[8,128], index: 1, kind: output, shape index: {}]
  %s2 = sld [smem:[#allocation0]]
  $region123: #{_lambda_.3} parent=0
    _
  %s4 = ssub.s32 1, %s2
  %s5 = scalar_select 0, %s4, %s2
  %6 = vst [vmem:[#allocation4] sm:$0xff] 0.0
  %p8 = scmp.lt.u32.totalorder 32, 8
  %p9 = pneg %p8
  // Predicated region
  $region2: #{_lambda_.3} parent=0 // pred_check
    _
  $region3: #{_lambda_.3} parent=0 // pred_check_branch
    %11 = sbr.rel (%p8) target = $region5
  $region4: #{_lambda_.3} parent=0 // pred_region
    %s26 = sand.u32 32, 7
    %p27 = scmp.eq.s32.totalorder %s26, 0
    // Predicated region
    $region17: #{_lambda_.3} parent=4 // pred_check
      %p28 = pneg %p27
    $region18: #{_lambda_.3} parent=4 // pred_check_branch
      %30 = sbr.rel (%p28) target = $region20
    $region19: #{_lambda_.3} parent=4 // pred_region
      loop: start=0, step=1, limit=1
      $region21: #{_lambda_.3} parent=19 // loop_pre_header
        _
      $region22: #{_lambda_.3} parent=19 // loop_header
        %s32 = sphi 0, %s36
        %p33 = scmp.ge.s32.totalorder %s32, 1
        %s37 = sphi %s0, %s0
        %s38 = sphi [#allocation2], [#allocation2]
      $region23: #{_lambda_.3} parent=19 // loop_header_branch
        %35 = sbr.rel (%p33) target = $region27
      $region24: #{_lambda_.3} parent=19 // loop_body
        %v39 = vld [vmem:[%s37] sm:$0xff]
        %40 = vst [vmem:[%s38] sm:$0xff] %v39
        %v41 = vld [vmem:[%s37 + $0x8] sm:$0xff]
        %42 = vst [vmem:[%s38 + $0x8] sm:$0xff] %v41
        %v43 = vld [vmem:[%s37 + $0x10] sm:$0xff]
        %44 = vst [vmem:[%s38 + $0x10] sm:$0xff] %v43
        %v45 = vld [vmem:[%s37 + $0x18] sm:$0xff]
        %46 = vst [vmem:[%s38 + $0x18] sm:$0xff] %v45
      $region25: #{_lambda_.3} parent=19 // loop_footer
        %s36 = sadd.s32 1, %s32
      $region26: #{_lambda_.3} parent=19 // loop_footer_branch
        %31 = sbr.rel target = $region22
      $region27: #{_lambda_.3} parent=19 // loop_exit
        _
    $region20: #{_lambda_.3} parent=4 // pred_fallthru
      _
    %p47 = pneg %p27
    // Predicated region
    $region28: #{_lambda_.3} parent=4 // pred_check
      _
    $region29: #{_lambda_.3} parent=4 // pred_check_branch
      %49 = sbr.rel (%p27) target = $region31
    $region30: #{_lambda_.3} parent=4 // pred_region
      %s50 = sand.u32 32, 7
    $region31: #{_lambda_.3} parent=4 // pred_fallthru
      _
  $region5: #{_lambda_.3} parent=0 // pred_fallthru
    _
  // Predicated region
  $region6: #{_lambda_.3} parent=0 // pred_check
    %p12 = pneg %p8
  $region7: #{_lambda_.3} parent=0 // pred_check_branch
    %14 = sbr.rel (%p12) target = $region9
  $region8: #{_lambda_.3} parent=0 // pred_region
    %s15 = sshllo.u32 0, 32
    loop: start=0, step=1, limit=1
    $region10: #{_lambda_.3} parent=8 // loop_pre_header
      _
    $region11: #{_lambda_.3} parent=8 // loop_header
      %s17 = sphi 0, %s21
      %p18 = scmp.ge.s32.totalorder %s17, 1
      %s22 = sphi %s0, %s0
      %s23 = sphi [#allocation2], [#allocation2]
    $region12: #{_lambda_.3} parent=8 // loop_header_branch
      %20 = sbr.rel (%p18) target = $region16
    $region13: #{_lambda_.3} parent=8 // loop_body
      %v24 = vld [vmem:[%s22] sm:%s15]
      %25 = vst [vmem:[%s23] sm:%s15] %v24
    $region14: #{_lambda_.3} parent=8 // loop_footer
      %s21 = sadd.s32 1, %s17
    $region15: #{_lambda_.3} parent=8 // loop_footer_branch
      %16 = sbr.rel target = $region11
    $region16: #{_lambda_.3} parent=8 // loop_exit
      _
  $region9: #{_lambda_.3} parent=0 // pred_fallthru
    _
  // Predicated region
  $region32: #{_lambda_.3} parent=0 // pred_check
    _
  $region33: #{_lambda_.3} parent=0 // pred_check_branch
    %53 = sbr.rel (0) target = $region35
  $region34: #{_lambda_.3} parent=0 // pred_region
    %54 = vsyncadd [#allocation3], 512
  $region35: #{_lambda_.3} parent=0 // pred_fallthru
    _
  loop: start=0, step=1, limit=2
  $region36: #{_lambda_.3} parent=0 // loop_pre_header
    _
  $region37: #{_lambda_.3} parent=0 // loop_header
    %s56 = sphi 0, %s60
    %p57 = scmp.ge.s32.totalorder %s56, 2
  $region38: #{_lambda_.3} parent=0 // loop_header_branch
    %59 = sbr.rel (%p57) target = $region42
  $region39: #{_lambda_.3} parent=0 // loop_body
    %p61 = scmp.lt.s32.totalorder %s56, 0
    %s62 = ssub.s32 0, %s56
    %s63 = scalar_select %p61, %s62, %s56
    %s64 = sand.u32 %s63, 1
    %s65 = ssub.s32 0, %s64
    %s66 = scalar_select %p61, %s65, %s64
    %p67 = scmp.ne.s32.totalorder %s66, 0
    %p68 = scmp.lt.s32.totalorder %s66, 0
    %p69 = pnand %p68, %p67
    %p70 = pneg %p69
    %s71 = sadd.s32 %s66, 2
    %s72 = scalar_select %p70, %s71, %s66
    %s73 = smul.u32 %s72, 4
    %s74 = smul.addr %s73, 8
    %s75 = scalar_lea.vmem [#allocation2], %s74
    %s76 = scalar_lea.sflag [#allocation3], %s72
    %s77 = smul.u32 4, 8
    %s78 = smul.u32 %s77, 1
    %s79 = sshll.u32 %s78, 4
    %80 = dma.done %s76, %s79
    %s81 = sadd.s32 %s56, 1
    %p82 = scmp.lt.s32.totalorder %s81, 2
    // Predicated region
    $region43: #{_lambda_.3} parent=39 // pred_check
      %p83 = pneg %p82
    $region44: #{_lambda_.3} parent=39 // pred_check_branch
      %85 = sbr.rel (%p83) target = $region46
    $region45: #{_lambda_.3} parent=39 // pred_region
      %s86 = smul.u32 %s81, 64
      %s87 = ssub.s32 1, %s72
      %s88 = sshra.s32 %s86, 3
      %s89 = sand.u32 %s86, 7
      %s90 = smul.addr %s88, 4
      %s91 = scalar_lea.vmem %s0, %s90
      %s92 = smul.u32 %s87, 4
      %s93 = smul.addr %s92, 8
      %s94 = scalar_lea.vmem [#allocation2], %s93
      %s95 = scalar_lea.sflag [#allocation3], %s87
      %p97 = scmp.lt.u32.totalorder 32, 8
      %p98 = pneg %p97
      // Predicated region
      $region47: #{_lambda_.3} parent=45 // pred_check
        _
      $region48: #{_lambda_.3} parent=45 // pred_check_branch
        %100 = sbr.rel (%p97) target = $region50
      $region49: #{_lambda_.3} parent=45 // pred_region
        %s115 = sand.u32 32, 7
        %p116 = scmp.eq.s32.totalorder %s115, 0
        // Predicated region
        $region62: #{_lambda_.3} parent=49 // pred_check
          %p117 = pneg %p116
        $region63: #{_lambda_.3} parent=49 // pred_check_branch
          %119 = sbr.rel (%p117) target = $region65
        $region64: #{_lambda_.3} parent=49 // pred_region
          loop: start=0, step=1, limit=1
          $region66: #{_lambda_.3} parent=64 // loop_pre_header
            _
          $region67: #{_lambda_.3} parent=64 // loop_header
            %s121 = sphi 0, %s125
            %p122 = scmp.ge.s32.totalorder %s121, 1
            %s126 = sphi %s91, %s91
            %s127 = sphi %s94, %s94
          $region68: #{_lambda_.3} parent=64 // loop_header_branch
            %124 = sbr.rel (%p122) target = $region72
          $region69: #{_lambda_.3} parent=64 // loop_body
            %v128 = vld [vmem:[%s126] sm:$0xff]
            %129 = vst [vmem:[%s127] sm:$0xff] %v128
            %v130 = vld [vmem:[%s126 + $0x8] sm:$0xff]
            %131 = vst [vmem:[%s127 + $0x8] sm:$0xff] %v130
            %v132 = vld [vmem:[%s126 + $0x10] sm:$0xff]
            %133 = vst [vmem:[%s127 + $0x10] sm:$0xff] %v132
            %v134 = vld [vmem:[%s126 + $0x18] sm:$0xff]
            %135 = vst [vmem:[%s127 + $0x18] sm:$0xff] %v134
          $region70: #{_lambda_.3} parent=64 // loop_footer
            %s125 = sadd.s32 1, %s121
          $region71: #{_lambda_.3} parent=64 // loop_footer_branch
            %120 = sbr.rel target = $region67
          $region72: #{_lambda_.3} parent=64 // loop_exit
            _
        $region65: #{_lambda_.3} parent=49 // pred_fallthru
          _
        %p136 = pneg %p116
        // Predicated region
        $region73: #{_lambda_.3} parent=49 // pred_check
          _
        $region74: #{_lambda_.3} parent=49 // pred_check_branch
          %138 = sbr.rel (%p116) target = $region76
        $region75: #{_lambda_.3} parent=49 // pred_region
          %s139 = sand.u32 32, 7
        $region76: #{_lambda_.3} parent=49 // pred_fallthru
          _
      $region50: #{_lambda_.3} parent=45 // pred_fallthru
        _
      // Predicated region
      $region51: #{_lambda_.3} parent=45 // pred_check
        %p101 = pneg %p97
      $region52: #{_lambda_.3} parent=45 // pred_check_branch
        %103 = sbr.rel (%p101) target = $region54
      $region53: #{_lambda_.3} parent=45 // pred_region
        %s104 = sshllo.u32 0, 32
        loop: start=0, step=1, limit=1
        $region55: #{_lambda_.3} parent=53 // loop_pre_header
          _
        $region56: #{_lambda_.3} parent=53 // loop_header
          %s106 = sphi 0, %s110
          %p107 = scmp.ge.s32.totalorder %s106, 1
          %s111 = sphi %s91, %s91
          %s112 = sphi %s94, %s94
        $region57: #{_lambda_.3} parent=53 // loop_header_branch
          %109 = sbr.rel (%p107) target = $region61
        $region58: #{_lambda_.3} parent=53 // loop_body
          %v113 = vld [vmem:[%s111] sm:%s104]
          %114 = vst [vmem:[%s112] sm:%s104] %v113
        $region59: #{_lambda_.3} parent=53 // loop_footer
          %s110 = sadd.s32 1, %s106
        $region60: #{_lambda_.3} parent=53 // loop_footer_branch
          %105 = sbr.rel target = $region56
        $region61: #{_lambda_.3} parent=53 // loop_exit
          _
      $region54: #{_lambda_.3} parent=45 // pred_fallthru
        _
      // Predicated region
      $region77: #{_lambda_.3} parent=45 // pred_check
        _
      $region78: #{_lambda_.3} parent=45 // pred_check_branch
        %142 = sbr.rel (0) target = $region80
      $region79: #{_lambda_.3} parent=45 // pred_region
        %143 = vsyncadd %s95, 512
      $region80: #{_lambda_.3} parent=45 // pred_fallthru
        _
    $region46: #{_lambda_.3} parent=39 // pred_fallthru
      _
    %v144 = vld [vmem:[%s75] sm:$0xff]
    %v145 = vld [vmem:[%s75 + $0x8] sm:$0xff]
    %v146 = vld [vmem:[%s75 + $0x10] sm:$0xff]
    %v147 = vld [vmem:[%s75 + $0x18] sm:$0xff]
    %v148 = vunpack.c.l.bf16 %v144
    %v149 = vunpack.c.h.bf16 %v144
    %v150 = vunpack.c.l.bf16 %v145
    %v151 = vunpack.c.h.bf16 %v145
    %v152 = vunpack.c.l.bf16 %v146
    %v153 = vunpack.c.h.bf16 %v146
    %v154 = vunpack.c.l.bf16 %v147
    %v155 = vunpack.c.h.bf16 %v147
    %v156 = vld [vmem:[#allocation4] sm:$0xff]
    %v157 = vmul.f32 %v148, %v148
    %v158 = vmul.f32 %v149, %v149
    %v159 = vmul.f32 %v150, %v150
    %v160 = vmul.f32 %v151, %v151
    %v161 = vmul.f32 %v152, %v152
    %v162 = vmul.f32 %v153, %v153
    %v163 = vmul.f32 %v154, %v154
    %v164 = vmul.f32 %v155, %v155
    %v165 = vadd.f32 %v157, %v158
    %v166 = vadd.f32 %v165, %v159
    %v167 = vadd.f32 %v166, %v160
    %v168 = vadd.f32 %v167, %v161
    %v169 = vadd.f32 %v168, %v162
    %v170 = vadd.f32 %v169, %v163
    %v171 = vadd.f32 %v170, %v164
    %v172 = vadd.f32 %v156, %v171
    %173 = vst [vmem:[#allocation4] sm:$0xff] %v172
  $region40: #{_lambda_.3} parent=0 // loop_footer
    %s60 = sadd.s32 1, %s56
  $region41: #{_lambda_.3} parent=0 // loop_footer_branch
    %55 = sbr.rel target = $region37
  $region42: #{_lambda_.3} parent=0 // loop_exit
    _
  %s174 = scalar_lea.vmem %s0, 64
  %p176 = scmp.lt.u32.totalorder 8, 8
  %p177 = pneg %p176
  // Predicated region
  $region81: #{_lambda_.3} parent=0 // pred_check
    _
  $region82: #{_lambda_.3} parent=0 // pred_check_branch
    %179 = sbr.rel (%p176) target = $region84
  $region83: #{_lambda_.3} parent=0 // pred_region
    %s194 = sand.u32 8, 7
    %p195 = scmp.eq.s32.totalorder %s194, 0
    // Predicated region
    $region96: #{_lambda_.3} parent=83 // pred_check
      %p196 = pneg %p195
    $region97: #{_lambda_.3} parent=83 // pred_check_branch
      %198 = sbr.rel (%p196) target = $region99
    $region98: #{_lambda_.3} parent=83 // pred_region
      loop: start=0, step=1, limit=1
      $region100: #{_lambda_.3} parent=98 // loop_pre_header
        _
      $region101: #{_lambda_.3} parent=98 // loop_header
        %s200 = sphi 0, %s204
        %p201 = scmp.ge.s32.totalorder %s200, 1
        %s205 = sphi %s174, %s174
        %s206 = sphi [#allocation2], [#allocation2]
      $region102: #{_lambda_.3} parent=98 // loop_header_branch
        %203 = sbr.rel (%p201) target = $region106
      $region103: #{_lambda_.3} parent=98 // loop_body
        %v207 = vld [vmem:[%s205] sm:$0xff]
        %208 = vst [vmem:[%s206] sm:$0xff] %v207
      $region104: #{_lambda_.3} parent=98 // loop_footer
        %s204 = sadd.s32 1, %s200
      $region105: #{_lambda_.3} parent=98 // loop_footer_branch
        %199 = sbr.rel target = $region101
      $region106: #{_lambda_.3} parent=98 // loop_exit
        _
    $region99: #{_lambda_.3} parent=83 // pred_fallthru
      _
    %p209 = pneg %p195
    // Predicated region
    $region107: #{_lambda_.3} parent=83 // pred_check
      _
    $region108: #{_lambda_.3} parent=83 // pred_check_branch
      %211 = sbr.rel (%p195) target = $region110
    $region109: #{_lambda_.3} parent=83 // pred_region
      %s212 = sand.u32 8, 7
    $region110: #{_lambda_.3} parent=83 // pred_fallthru
      _
  $region84: #{_lambda_.3} parent=0 // pred_fallthru
    _
  // Predicated region
  $region85: #{_lambda_.3} parent=0 // pred_check
    %p180 = pneg %p176
  $region86: #{_lambda_.3} parent=0 // pred_check_branch
    %182 = sbr.rel (%p180) target = $region88
  $region87: #{_lambda_.3} parent=0 // pred_region
    %s183 = sshllo.u32 0, 8
    loop: start=0, step=1, limit=1
    $region89: #{_lambda_.3} parent=87 // loop_pre_header
      _
    $region90: #{_lambda_.3} parent=87 // loop_header
      %s185 = sphi 0, %s189
      %p186 = scmp.ge.s32.totalorder %s185, 1
      %s190 = sphi %s174, %s174
      %s191 = sphi [#allocation2], [#allocation2]
    $region91: #{_lambda_.3} parent=87 // loop_header_branch
      %188 = sbr.rel (%p186) target = $region95
    $region92: #{_lambda_.3} parent=87 // loop_body
      %v192 = vld [vmem:[%s190] sm:%s183]
      %193 = vst [vmem:[%s191] sm:%s183] %v192
    $region93: #{_lambda_.3} parent=87 // loop_footer
      %s189 = sadd.s32 1, %s185
    $region94: #{_lambda_.3} parent=87 // loop_footer_branch
      %184 = sbr.rel target = $region90
    $region95: #{_lambda_.3} parent=87 // loop_exit
      _
  $region88: #{_lambda_.3} parent=0 // pred_fallthru
    _
  // Predicated region
  $region111: #{_lambda_.3} parent=0 // pred_check
    _
  $region112: #{_lambda_.3} parent=0 // pred_check_branch
    %215 = sbr.rel (0) target = $region114
  $region113: #{_lambda_.3} parent=0 // pred_region
    %216 = vsyncadd [#allocation3], 128
  $region114: #{_lambda_.3} parent=0 // pred_fallthru
    _
  %s217 = smul.u32 4, 2
  %s218 = smul.u32 %s217, 1
  %s219 = sshll.u32 %s218, 4
  %220 = dma.done [#allocation3], %s219
  %v221 = vld [vmem:[#allocation2] sm:$0xff]
  %v222 = vunpack.c.l.bf16 %v221
  %v223 = vunpack.c.h.bf16 %v221
  %v224 = vld [vmem:[#allocation4] sm:$0xff]
  %v225 = vmul.f32 %v222, %v222
  %v226 = vmul.f32 %v223, %v223
  %v227 = vadd.f32 %v225, %v226
  %v228 = vadd.f32 %v224, %v227
  %229 = vst [vmem:[#allocation4] sm:$0xff] %v228
  %v230 = vld [vmem:[#allocation4] sm:$0xff]
  %231 = vst [vmem:[%s1] sm:$0xff] %v230
  // Predicated region
  $region115: #{_lambda_.3} parent=0 // pred_check
    _
  $region116: #{_lambda_.3} parent=0 // pred_check_branch
    %233 = sbr.rel (0) target = $region118
  $region117: #{_lambda_.3} parent=0 // pred_region
    _
  $region118: #{_lambda_.3} parent=0 // pred_fallthru
    _
  // Predicated region
  $region119: #{_lambda_.3} parent=0 // pred_check
    _
  $region120: #{_lambda_.3} parent=0 // pred_check_branch
    %235 = sbr.rel (0) target = $region122
  $region121: #{_lambda_.3} parent=0 // pred_region
    _
  $region122: #{_lambda_.3} parent=0 // pred_fallthru
    _
  %236 = vsyncmov [#allocation3]
  %s237 = vpop.sfrf %236
  %p238 = scmp.eq.s32.totalorder %s237, 0
  %p239 = pneg %p238
  %241 = shalt.err (%p239)
  %s242 = scalar_lea.sflag [#allocation3], 1
  %243 = vsyncmov %s242
  %s244 = vpop.sfrf %243
  %p245 = scmp.eq.s32.totalorder %s244, 0
  %p246 = pneg %p245
  %248 = shalt.err (%p246)

</llo_original>
